<compile_context>
chip_gen: v7x
topology: tpu7x:2x2x1
jax: 0.10.0
libtpu: 0.0.40
codegen_flags: <defaults>
</compile_context>

<pallas_src>
import math
import functools

import jax
import jax.numpy as jnp
from jax import lax
from jax.experimental import pallas as pl
from jax.experimental.pallas import tpu as pltpu


def _round_up(x, m):
    return (x + m - 1) // m * m


def _superrelora_kernel(x_ref, w_ref, a_ref, b_ref, bias_ref, o_ref,
                        acc_ref, xa_ref, *, scale):
    n = pl.program_id(1)
    k = pl.program_id(2)
    nk = pl.num_programs(2)

    x = x_ref[...]  # [tm, tk], native dtype (bf16/f32) straight to the MXU

    # Init the base accumulator with the broadcast bias tile at the first K step.
    @pl.when(k == 0)
    def _():
        acc_ref[...] = jnp.broadcast_to(
            bias_ref[...].astype(jnp.float32), acc_ref.shape)

    # Zero the LoRA xa accumulator once per M tile (first N, first K step).
    @pl.when(jnp.logical_and(n == 0, k == 0))
    def _():
        xa_ref[...] = jnp.zeros_like(xa_ref)

    # Base path: acc += x[tm, tk] @ W[tn, tk]^T  (contract last dims, f32 acc).
    acc_ref[...] += lax.dot_general(
        x, w_ref[...],
        dimension_numbers=(((1,), (1,)), ((), ())),
        preferred_element_type=jnp.float32)

    # LoRA first matmul: xa += x[tm, tk] @ A[r, tk]^T.
    # Only computed on the n == 0 pass; the scratch persists and is reused for
    # every other N tile of this M tile (hence N is marked "arbitrary").
    @pl.when(n == 0)
    def _():
        xa_ref[...] += lax.dot_general(
            x, a_ref[...],
            dimension_numbers=(((1,), (1,)), ((), ())),
            preferred_element_type=jnp.float32)

    # Finalize at the last K step: scale the small [tm, r] xa, do the second
    # LoRA matmul against B[tn, r]^T, fuse into acc and write out once.
    @pl.when(k == nk - 1)
    def _():
        xa_scaled = (xa_ref[...] * scale).astype(b_ref.dtype)
        lora = lax.dot_general(
            xa_scaled, b_ref[...],
            dimension_numbers=(((1,), (1,)), ((), ())),
            preferred_element_type=jnp.float32)
        o_ref[...] = (acc_ref[...] + lora).astype(o_ref.dtype)


def superrelora_linear(x, weight, bias, lora_A, lora_B, *, scale,
                       tm=256, tn=256, tk=512):
    """
    x:       [..., in_f]
    weight:  [out_f, in_f]   (untransposed, PyTorch layout)
    bias:    [out_f] or None
    lora_A:  [r, in_f]
    lora_B:  [out_f, r]
    """
    in_f = x.shape[-1]
    out_f = weight.shape[0]
    r = lora_A.shape[0]

    lead_shape = x.shape[:-1]
    M = int(math.prod(lead_shape)) if lead_shape else 1
    x2d = x.reshape(M, in_f)

    if bias is None:
        bias = jnp.zeros((out_f,), dtype=x.dtype)
    bias2d = bias.reshape(1, out_f)

    # --- tile-size selection (largest that makes sense for the shape) ---
    sub = max(8, 32 // jnp.dtype(x.dtype).itemsize)  # 8 f32 / 16 bf16 / 32 int8
    tm_eff = min(tm, _round_up(M, sub))
    Mp = _round_up(M, tm_eff)

    if out_f <= tn:
        tn_eff = out_f                      # full-dim block (no 128 constraint)
    else:
        tn_eff = tn
        assert tn_eff % 128 == 0, "tn must be a multiple of 128 when tiling N"
    Np = _round_up(out_f, tn_eff)

    if in_f <= tk:
        tk_eff = in_f                       # full-dim block
    else:
        tk_eff = tk
        assert tk_eff % 128 == 0, "tk must be a multiple of 128 when tiling K"
    Kp = _round_up(in_f, tk_eff)

    # --- zero-pad to tile multiples (zeros contribute nothing; sliced after) ---
    def pad2(a, rows, cols):
        pr, pc = rows - a.shape[0], cols - a.shape[1]
        if pr or pc:
            a = jnp.pad(a, ((0, pr), (0, pc)))
        return a

    x2d_p  = pad2(x2d, Mp, Kp)
    w_p    = pad2(weight, Np, Kp)
    a_p    = pad2(lora_A, r, Kp)
    b_p    = pad2(lora_B, Np, r)
    bias_p = pad2(bias2d, 1, Np)

    grid = (Mp // tm_eff, Np // tn_eff, Kp // tk_eff)

    kernel = functools.partial(_superrelora_kernel, scale=float(scale))

    out2d = pl.pallas_call(
        kernel,
        out_shape=jax.ShapeDtypeStruct((Mp, Np), x.dtype),
        grid_spec=pltpu.PrefetchScalarGridSpec(
            num_scalar_prefetch=0,
            grid=grid,
            in_specs=[
                pl.BlockSpec((tm_eff, tk_eff), lambda m, n, k: (m, k)),  # x
                pl.BlockSpec((tn_eff, tk_eff), lambda m, n, k: (n, k)),  # W
                pl.BlockSpec((r, tk_eff),      lambda m, n, k: (0, k)),  # A
                pl.BlockSpec((tn_eff, r),      lambda m, n, k: (n, 0)),  # B
                pl.BlockSpec((1, tn_eff),      lambda m, n, k: (0, n)),  # bias
            ],
            out_specs=pl.BlockSpec((tm_eff, tn_eff), lambda m, n, k: (m, n)),
            scratch_shapes=[
                pltpu.VMEM((tm_eff, tn_eff), jnp.float32),  # base+bias acc
                pltpu.VMEM((tm_eff, r), jnp.float32),       # x @ A^T acc
            ],
        ),
        compiler_params=pltpu.CompilerParams(
            # N must be sequential because the xa scratch computed at n == 0 is
            # reused for n > 0; M is safe to shard across cores.
            dimension_semantics=("parallel", "arbitrary", "arbitrary"),
            vmem_limit_bytes=64 * 1024 * 1024,
        ),
    )(x2d_p, w_p, a_p, b_p, bias_p)

    out2d = out2d[:M, :out_f]
    return out2d.reshape(*lead_shape, out_f)


def init_params(key, in_f, out_f, r):
    """Deterministic init matching the PyTorch module's __init__ semantics."""
    kw, ka = jax.random.split(key, 2)
    # kaiming_uniform_(a=sqrt(5)) -> bound = 1/sqrt(fan_in)
    bound_w = 1.0 / math.sqrt(in_f)
    weight = jax.random.uniform(kw, (out_f, in_f), jnp.float32,
                                minval=-bound_w, maxval=bound_w)
    bias = jnp.zeros((out_f,), jnp.float32)
    bound_a = 1.0 / math.sqrt(in_f)
    lora_A = jax.random.uniform(ka, (r, in_f), jnp.float32,
                                minval=-bound_a, maxval=bound_a)
    lora_B = jnp.zeros((out_f, r), jnp.float32)
    return weight, bias, lora_A, lora_B


if __name__ == "__main__":
    key = jax.random.PRNGKey(0)
    k_x, k_p, k_b = jax.random.split(key, 3)

    batch, seq = 2, 8
    in_f, out_f, r, alpha = 32, 32, 16, 32
    scale = alpha / r

    x = jax.random.normal(k_x, (batch, seq, in_f), jnp.float32)
    weight, bias, lora_A, lora_B = init_params(k_p, in_f, out_f, r)
    # make lora_B nonzero so the LoRA branch is actually exercised
    lora_B = 0.01 * jax.random.normal(k_b, (out_f, r), jnp.float32)

    out = superrelora_linear(x, weight, bias, lora_A, lora_B, scale=scale)
    out = jax.block_until_ready(out)

    # pure-JAX reference
    ref = x @ weight.T + bias + scale * ((x @ lora_A.T) @ lora_B.T)
    assert out.shape == (batch, seq, out_f)
    assert jnp.allclose(out, ref, atol=1e-4, rtol=1e-4), "mismatch vs reference"

    # also exercise the padding / tile-unaligned path (M = 15)
    x2 = jax.random.normal(k_x, (3, 5, in_f), jnp.float32)
    out2 = jax.block_until_ready(
        superrelora_linear(x2, weight, bias, lora_A, lora_B, scale=scale))
    ref2 = x2 @ weight.T + bias + scale * ((x2 @ lora_A.T) @ lora_B.T)
    assert jnp.allclose(out2, ref2, atol=1e-4, rtol=1e-4), "padded-path mismatch"

    print("KERNEL_OK")
</pallas_src>

<mosaic_0001>
module attributes {stable_mosaic.version = 11 : i64} {
  func.func @_superrelora_kernel(%arg0: i32, %arg1: i32, %arg2: i32, %arg3: memref<16x32xf32, #tpu.memory_space<vmem>>, %arg4: memref<32x32xf32, #tpu.memory_space<vmem>>, %arg5: memref<16x32xf32, #tpu.memory_space<vmem>>, %arg6: memref<32x16xf32, #tpu.memory_space<vmem>>, %arg7: memref<1x32xf32, #tpu.memory_space<vmem>>, %arg8: memref<16x32xf32, #tpu.memory_space<vmem>>, %arg9: memref<16x32xf32, #tpu.memory_space<vmem>>, %arg10: memref<16x16xf32, #tpu.memory_space<vmem>>) attributes {dimension_semantics = [#tpu.dimension_semantics<parallel>, #tpu.dimension_semantics<arbitrary>, #tpu.dimension_semantics<arbitrary>], iteration_bounds = array<i64: 1, 1, 1>, scalar_prefetch = 0 : i64, scratch_operands = 2 : i64, tpu.core_type = #tpu.core_type<tc>, window_params = [{transform_indices = @transform_0, window_bounds = array<i64: 16, 32>}, {transform_indices = @transform_1, window_bounds = array<i64: 32, 32>}, {transform_indices = @transform_2, window_bounds = array<i64: 16, 32>}, {transform_indices = @transform_3, window_bounds = array<i64: 32, 16>}, {transform_indices = @transform_4, window_bounds = array<i64: 1, 32>}, {transform_indices = @transform_5, window_bounds = array<i64: 16, 32>}]} {
    %c0 = arith.constant 0 : index
    %c0_0 = arith.constant 0 : index
    %0 = vector.load %arg3[%c0, %c0_0] : memref<16x32xf32, #tpu.memory_space<vmem>>, vector<16x32xf32>
    %c0_i32 = arith.constant 0 : i32
    %1 = arith.cmpi eq, %arg2, %c0_i32 : i32
    %2 = arith.extui %1 : i1 to i32
    %c0_i32_1 = arith.constant 0 : i32
    %3 = arith.cmpi ne, %2, %c0_i32_1 : i32
    scf.if %3 {
      %c0_15 = arith.constant 0 : index
      %c0_16 = arith.constant 0 : index
      %20 = vector.load %arg7[%c0_15, %c0_16] : memref<1x32xf32, #tpu.memory_space<vmem>>, vector<1x32xf32>
      %21 = vector.shape_cast %20 : vector<1x32xf32> to vector<1x32xf32>
      %22 = vector.broadcast %21 : vector<1x32xf32> to vector<16x32xf32>
      %c0_17 = arith.constant 0 : index
      %c0_18 = arith.constant 0 : index
      %23 = vector.load %arg9[%c0_17, %c0_18] : memref<16x32xf32, #tpu.memory_space<vmem>>, vector<16x32xf32>
      tpu.vector_store %arg9[%c0_17, %c0_18], %22 {strides = array<i32>} : memref<16x32xf32, #tpu.memory_space<vmem>>, vector<16x32xf32>,
    } else {
    }
    %c0_i32_2 = arith.constant 0 : i32
    %4 = arith.cmpi eq, %arg1, %c0_i32_2 : i32
    %c0_i32_3 = arith.constant 0 : i32
    %5 = arith.cmpi eq, %arg2, %c0_i32_3 : i32
    %6 = arith.andi %4, %5 : i1
    %7 = arith.extui %6 : i1 to i32
    %c0_i32_4 = arith.constant 0 : i32
    %8 = arith.cmpi ne, %7, %c0_i32_4 : i32
    scf.if %8 {
      %cst_15 = arith.constant 0.000000e+00 : f32
      %20 = vector.broadcast %cst_15 : f32 to vector<16x16xf32>
      %c0_16 = arith.constant 0 : index
      %c0_17 = arith.constant 0 : index
      %21 = vector.load %arg10[%c0_16, %c0_17] : memref<16x16xf32, #tpu.memory_space<vmem>>, vector<16x16xf32>
      tpu.vector_store %arg10[%c0_16, %c0_17], %20 {strides = array<i32>} : memref<16x16xf32, #tpu.memory_space<vmem>>, vector<16x16xf32>,
    } else {
    }
    %c0_5 = arith.constant 0 : index
    %c0_6 = arith.constant 0 : index
    %9 = vector.load %arg9[%c0_5, %c0_6] : memref<16x32xf32, #tpu.memory_space<vmem>>, vector<16x32xf32>
    %c0_7 = arith.constant 0 : index
    %c0_8 = arith.constant 0 : index
    %10 = vector.load %arg4[%c0_7, %c0_8] : memref<32x32xf32, #tpu.memory_space<vmem>>, vector<32x32xf32>
    %cst = arith.constant dense<0.000000e+00> : vector<16x32xf32>
    %11 = tpu.matmul %0, %10, %cst {dimension_numbers = #tpu.dot_dimension_numbers<[1], [1], [0], [0], [0, 0, 1, 0], [], []>} : vector<16x32xf32>, vector<32x32xf32>, vector<16x32xf32> -> vector<16x32xf32>
    %12 = arith.addf %9, %11 : vector<16x32xf32>
    %c0_9 = arith.constant 0 : index
    %c0_10 = arith.constant 0 : index
    %13 = vector.load %arg9[%c0_9, %c0_10] : memref<16x32xf32, #tpu.memory_space<vmem>>, vector<16x32xf32>
    tpu.vector_store %arg9[%c0_9, %c0_10], %12 {strides = array<i32>} : memref<16x32xf32, #tpu.memory_space<vmem>>, vector<16x32xf32>,
    %c0_i32_11 = arith.constant 0 : i32
    %14 = arith.cmpi eq, %arg1, %c0_i32_11 : i32
    %15 = arith.extui %14 : i1 to i32
    %c0_i32_12 = arith.constant 0 : i32
    %16 = arith.cmpi ne, %15, %c0_i32_12 : i32
    scf.if %16 {
      %c0_15 = arith.constant 0 : index
      %c0_16 = arith.constant 0 : index
      %20 = vector.load %arg10[%c0_15, %c0_16] : memref<16x16xf32, #tpu.memory_space<vmem>>, vector<16x16xf32>
      %c0_17 = arith.constant 0 : index
      %c0_18 = arith.constant 0 : index
      %21 = vector.load %arg5[%c0_17, %c0_18] : memref<16x32xf32, #tpu.memory_space<vmem>>, vector<16x32xf32>
      %cst_19 = arith.constant dense<0.000000e+00> : vector<16x16xf32>
      %22 = tpu.matmul %0, %21, %cst_19 {dimension_numbers = #tpu.dot_dimension_numbers<[1], [1], [0], [0], [0, 0, 1, 0], [], []>} : vector<16x32xf32>, vector<16x32xf32>, vector<16x16xf32> -> vector<16x16xf32>
      %23 = arith.addf %20, %22 : vector<16x16xf32>
      %c0_20 = arith.constant 0 : index
      %c0_21 = arith.constant 0 : index
      %24 = vector.load %arg10[%c0_20, %c0_21] : memref<16x16xf32, #tpu.memory_space<vmem>>, vector<16x16xf32>
      tpu.vector_store %arg10[%c0_20, %c0_21], %23 {strides = array<i32>} : memref<16x16xf32, #tpu.memory_space<vmem>>, vector<16x16xf32>,
    } else {
    }
    %c0_i32_13 = arith.constant 0 : i32
    %17 = arith.cmpi eq, %arg2, %c0_i32_13 : i32
    %18 = arith.extui %17 : i1 to i32
    %c0_i32_14 = arith.constant 0 : i32
    %19 = arith.cmpi ne, %18, %c0_i32_14 : i32
    scf.if %19 {
      %c0_15 = arith.constant 0 : index
      %c0_16 = arith.constant 0 : index
      %20 = vector.load %arg10[%c0_15, %c0_16] : memref<16x16xf32, #tpu.memory_space<vmem>>, vector<16x16xf32>
      %cst_17 = arith.constant 2.000000e+00 : f32
      %21 = vector.broadcast %cst_17 : f32 to vector<16x16xf32>
      %22 = arith.mulf %20, %21 : vector<16x16xf32>
      %c0_18 = arith.constant 0 : index
      %c0_19 = arith.constant 0 : index
      %23 = vector.load %arg6[%c0_18, %c0_19] : memref<32x16xf32, #tpu.memory_space<vmem>>, vector<32x16xf32>
      %cst_20 = arith.constant dense<0.000000e+00> : vector<16x32xf32>
      %24 = tpu.matmul %22, %23, %cst_20 {dimension_numbers = #tpu.dot_dimension_numbers<[1], [1], [0], [0], [0, 0, 1, 0], [], []>} : vector<16x16xf32>, vector<32x16xf32>, vector<16x32xf32> -> vector<16x32xf32>
      %c0_21 = arith.constant 0 : index
      %c0_22 = arith.constant 0 : index
      %25 = vector.load %arg9[%c0_21, %c0_22] : memref<16x32xf32, #tpu.memory_space<vmem>>, vector<16x32xf32>
      %26 = arith.addf %25, %24 : vector<16x32xf32>
      %c0_23 = arith.constant 0 : index
      %c0_24 = arith.constant 0 : index
      %27 = vector.load %arg8[%c0_23, %c0_24] : memref<16x32xf32, #tpu.memory_space<vmem>>, vector<16x32xf32>
      tpu.vector_store %arg8[%c0_23, %c0_24], %26 {strides = array<i32>} : memref<16x32xf32, #tpu.memory_space<vmem>>, vector<16x32xf32>,
    } else {
    }
    return
  }
  func.func @transform_0(%arg0: i32, %arg1: i32, %arg2: i32) -> (i32, i32) {
    %c0_i32 = arith.constant 0 : i32
    return %arg0, %arg2 : i32, i32
  }
  func.func @transform_1(%arg0: i32, %arg1: i32, %arg2: i32) -> (i32, i32) {
    %c0_i32 = arith.constant 0 : i32
    return %arg1, %arg2 : i32, i32
  }
  func.func @transform_2(%arg0: i32, %arg1: i32, %arg2: i32) -> (i32, i32) {
    %c0_i32 = arith.constant 0 : i32
    %c0_i32_0 = arith.constant 0 : i32
    return %c0_i32, %arg2 : i32, i32
  }
  func.func @transform_3(%arg0: i32, %arg1: i32, %arg2: i32) -> (i32, i32) {
    %c0_i32 = arith.constant 0 : i32
    %c0_i32_0 = arith.constant 0 : i32
    return %arg1, %c0_i32 : i32, i32
  }
  func.func @transform_4(%arg0: i32, %arg1: i32, %arg2: i32) -> (i32, i32) {
    %c0_i32 = arith.constant 0 : i32
    %c0_i32_0 = arith.constant 0 : i32
    return %c0_i32, %arg1 : i32, i32
  }
  func.func @transform_5(%arg0: i32, %arg1: i32, %arg2: i32) -> (i32, i32) {
    %c0_i32 = arith.constant 0 : i32
    return %arg0, %arg1 : i32, i32
  }
}

</mosaic_0001>

<llo_original>
// kernel: tpu_custom_call.1
$region0: #{tpu_custom_call.1}
  #allocation0 [shape = 'u32[]', space=smem, size = 0x4, offset = 0x4, fixed_abs, tag = 'smem constant byte address 0x4 - core index']
  #allocation1 [shape = 'u32[144,128]{1,0:T(1,128)}', space=vmem, size = 0x12000, scoped, tag = 'internal scratch']
  #allocation2 [shape = 'f32[16,32]{1,0:T(8,128)}', space=vmem, size = 0x2000, scoped, tag = 'scratch operand']
  #allocation3 [shape = 'f32[16,16]{1,0:T(8,128)}', space=vmem, size = 0x2000, scoped, tag = 'scratch operand']
  %s0 = inlined_call_operand.hbm [shape: f32[16,32], index: 0, kind: input, shape index: {}]
  %s1 = inlined_call_operand.hbm [shape: f32[32,32], index: 1, kind: input, shape index: {}]
  %s2 = inlined_call_operand.hbm [shape: f32[16,32], index: 2, kind: input, shape index: {}]
  %s3 = inlined_call_operand.hbm [shape: f32[32,16], index: 3, kind: input, shape index: {}]
  %s4 = inlined_call_operand.hbm [shape: f32[1,32], index: 4, kind: input, shape index: {}]
  %s5 = inlined_call_operand.hbm [shape: f32[16,32], index: 5, kind: output, shape index: {}]
  %s6 = sld [smem:[#allocation0]]
  $region66: #{tpu_custom_call.1} parent=0
    _
  %s8 = ssub.s32 1, %s6
  %s9 = scalar_select 0, %s8, %s6
  $region1: #{tpu_custom_call.1} parent=0
    #allocation4 [shape = 'u8[8192]{0}', space=vmem, size = 0x2000, scoped, tag = 'input window, operand 0, single buffered']
    #allocation5 [shape = 's32[1]{0}', space=sflag, size = 0x4, scoped, tag = 'scoped memory for tpu_custom_call.1']
    #allocation6 [shape = 's32[1]{0}', space=sflag, size = 0x4, scoped, tag = 'scoped memory for tpu_custom_call.1']
    #allocation7 [shape = 'u8[16384]{0}', space=vmem, size = 0x4000, scoped, tag = 'input window, operand 1, single buffered']
    #allocation8 [shape = 's32[1]{0}', space=sflag, size = 0x4, scoped, tag = 'scoped memory for tpu_custom_call.1']
    #allocation9 [shape = 'u8[8192]{0}', space=vmem, size = 0x2000, scoped, tag = 'input window, operand 2, single buffered']
    #allocation10 [shape = 'u8[16384]{0}', space=vmem, size = 0x4000, scoped, tag = 'input window, operand 3, single buffered']
    #allocation11 [shape = 's32[1]{0}', space=sflag, size = 0x4, scoped, tag = 'scoped memory for tpu_custom_call.1']
    #allocation12 [shape = 'u8[512]{0}', space=vmem, size = 0x400, scoped, tag = 'input window, operand 4, single buffered']
    #allocation13 [shape = 'u8[8192]{0}', space=vmem, size = 0x2000, scoped, tag = 'output window, operand 0, single buffered']
    %10 = vsyncpa [#allocation5], 0
    %11 = vsyncpa [#allocation8], 0
    %12 = vsyncpa [#allocation11], 0
    %13 = vsyncpa [#allocation6], 0
    // Predicated region
    $region2: #{tpu_custom_call.1} parent=1 // pred_check
      _
    $region3: #{tpu_custom_call.1} parent=1 // pred_check_branch
      %15 = sbr.rel (0) target = $region5
    $region4: #{tpu_custom_call.1} parent=1 // pred_region
      %s17 = ssub.s32 256, 256
      %18 = vsyncadd [#allocation5], %s17
      %s19 = sshll.u32 [#allocation4], 4
      %s20 = int_to_ptr.vmem [resolvable:$true] %s19
      %25 = dma.hbm_to_vmem [thread:$0]  %s0, 256, %s20, [#allocation5], 128, 128, 8
    $region5: #{tpu_custom_call.1} parent=1 // pred_fallthru
      _
    // Predicated region
    $region6: #{tpu_custom_call.1} parent=1 // pred_check
      _
    $region7: #{tpu_custom_call.1} parent=1 // pred_check_branch
      %27 = sbr.rel (0) target = $region9
    $region8: #{tpu_custom_call.1} parent=1 // pred_region
      %s29 = ssub.s32 512, 512
      %30 = vsyncadd [#allocation8], %s29
      %s31 = sshll.u32 [#allocation7], 4
      %s32 = int_to_ptr.vmem [resolvable:$true] %s31
      %37 = dma.hbm_to_vmem [thread:$0]  %s1, 512, %s32, [#allocation8], 128, 128, 8
    $region9: #{tpu_custom_call.1} parent=1 // pred_fallthru
      _
    // Predicated region
    $region10: #{tpu_custom_call.1} parent=1 // pred_check
      _
    $region11: #{tpu_custom_call.1} parent=1 // pred_check_branch
      %39 = sbr.rel (0) target = $region13
    $region12: #{tpu_custom_call.1} parent=1 // pred_region
      %s41 = ssub.s32 256, 256
      %42 = vsyncadd [#allocation8], %s41
      %s43 = sshll.u32 [#allocation9], 4
      %s44 = int_to_ptr.vmem [resolvable:$true] %s43
      %49 = dma.hbm_to_vmem [thread:$0]  %s2, 256, %s44, [#allocation8], 128, 128, 8
    $region13: #{tpu_custom_call.1} parent=1 // pred_fallthru
      _
    // Predicated region
    $region14: #{tpu_custom_call.1} parent=1 // pred_check
      _
    $region15: #{tpu_custom_call.1} parent=1 // pred_check_branch
      %51 = sbr.rel (0) target = $region17
    $region16: #{tpu_custom_call.1} parent=1 // pred_region
      %s53 = ssub.s32 512, 512
      %54 = vsyncadd [#allocation11], %s53
      %s55 = sshll.u32 [#allocation10], 4
      %s56 = int_to_ptr.vmem [resolvable:$true] %s55
      %61 = dma.hbm_to_vmem [thread:$0]  %s3, 512, %s56, [#allocation11], 128, 128, 8
    $region17: #{tpu_custom_call.1} parent=1 // pred_fallthru
      _
    // Predicated region
    $region18: #{tpu_custom_call.1} parent=1 // pred_check
      _
    $region19: #{tpu_custom_call.1} parent=1 // pred_check_branch
      %63 = sbr.rel (0) target = $region21
    $region20: #{tpu_custom_call.1} parent=1 // pred_region
      %s65 = ssub.s32 16, 16
      %66 = vsyncadd [#allocation11], %s65
      %s68 = sshll.u32 [#allocation12], 4
      %s69 = int_to_ptr.vmem [resolvable:$true] %s68
      %71 = dma.hbm_to_vmem [thread:$0]  %s4, 16, %s69, [#allocation11]
    $region21: #{tpu_custom_call.1} parent=1 // pred_fallthru
      _
    // Predicated region
    $region22: #{tpu_custom_call.1} parent=1 // pred_check
      _
    $region23: #{tpu_custom_call.1} parent=1 // pred_check_branch
      %73 = sbr.rel (0) target = $region25
    $region24: #{tpu_custom_call.1} parent=1 // pred_region
      %74 = dma.done [#allocation5], 256
    $region25: #{tpu_custom_call.1} parent=1 // pred_fallthru
      _
    // Predicated region
    $region26: #{tpu_custom_call.1} parent=1 // pred_check
      _
    $region27: #{tpu_custom_call.1} parent=1 // pred_check_branch
      %76 = sbr.rel (0) target = $region29
    $region28: #{tpu_custom_call.1} parent=1 // pred_region
      %77 = dma.done [#allocation8], 512
    $region29: #{tpu_custom_call.1} parent=1 // pred_fallthru
      _
    // Predicated region
    $region30: #{tpu_custom_call.1} parent=1 // pred_check
      _
    $region31: #{tpu_custom_call.1} parent=1 // pred_check_branch
      %79 = sbr.rel (0) target = $region33
    $region32: #{tpu_custom_call.1} parent=1 // pred_region
      %80 = dma.done [#allocation8], 256
    $region33: #{tpu_custom_call.1} parent=1 // pred_fallthru
      _
    // Predicated region
    $region34: #{tpu_custom_call.1} parent=1 // pred_check
      _
    $region35: #{tpu_custom_call.1} parent=1 // pred_check_branch
      %82 = sbr.rel (0) target = $region37
    $region36: #{tpu_custom_call.1} parent=1 // pred_region
      %83 = dma.done [#allocation11], 512
    $region37: #{tpu_custom_call.1} parent=1 // pred_fallthru
      _
    // Predicated region
    $region38: #{tpu_custom_call.1} parent=1 // pred_check
      _
    $region39: #{tpu_custom_call.1} parent=1 // pred_check_branch
      %85 = sbr.rel (0) target = $region41
    $region40: #{tpu_custom_call.1} parent=1 // pred_region
      %86 = dma.done [#allocation11], 16
    $region41: #{tpu_custom_call.1} parent=1 // pred_fallthru
      _
    %v87 = vld [vmem:[#allocation4] sm:$0xff]
    %v88 = vld [vmem:[#allocation4 + $0x8] sm:$0xff]
    %p89 = scmp.eq.s32.totalorder 0, 0
    // Predicated region
    $region42: #{tpu_custom_call.1} parent=1 // pred_check
      %p90 = pneg %p89
    $region43: #{tpu_custom_call.1} parent=1 // pred_check_branch
      %92 = sbr.rel (%p90) target = $region45
    $region44: #{tpu_custom_call.1} parent=1 // pred_region
      %v93 = vld [vmem:[#allocation12] sm:$0x1]
      %v95 = vlaneseq
      %v96 = vshrl.u32 %v95, 7
      %v97 = vsub.s32 0, %v96
      %v98 = vrot.slane %v93, %v97
      %vm100 = vcmask 261120
      %101 = vst.msk [vmem:[#allocation2] sm:$0xff] %vm100, %v98
      %102 = vst.msk [vmem:[#allocation2 + $0x8] sm:$0xff] %vm100, %v98
    $region45: #{tpu_custom_call.1} parent=1 // pred_fallthru
      _
    %p103 = scmp.eq.s32.totalorder 0, 0
    %p104 = pnand %p103, %p89
    %p105 = pneg %p104
    // Predicated region
    $region46: #{tpu_custom_call.1} parent=1 // pred_check
      _
    $region47: #{tpu_custom_call.1} parent=1 // pred_check_branch
      %107 = sbr.rel (%p104) target = $region49
    $region48: #{tpu_custom_call.1} parent=1 // pred_region
      %vm108 = vcmask 130048
      %109 = vst.msk [vmem:[#allocation3] sm:$0xff] %vm108, 0.0
      %110 = vst.msk [vmem:[#allocation3 + $0x8] sm:$0xff] %vm108, 0.0
    $region49: #{tpu_custom_call.1} parent=1 // pred_fallthru
      _
    %v111 = vld [vmem:[#allocation2] sm:$0xff]
    %v112 = vld [vmem:[#allocation2 + $0x8] sm:$0xff]
    %v113 = vld [vmem:[#allocation7] sm:$0xff]
    %v114 = vld [vmem:[#allocation7 + $0x8] sm:$0xff]
    %v115 = vld [vmem:[#allocation7 + $0x10] sm:$0xff]
    %v116 = vld [vmem:[#allocation7 + $0x18] sm:$0xff]
    %vm117 = vcmask 261120
    %v119 = vsel %vm117, %v87, 0
    %v122 = vsel %vm117, %v88, 0
    %v125 = vsel %vm117, %v113, 0
    %v128 = vsel %vm117, %v114, 0
    %v131 = vsel %vm117, %v115, 0
    %v134 = vsel %vm117, %v116, 0
    %136 = vmatprep.subr.mxu0 0.0
    %137 = vmatpush1.xpose.msra.mxu0 %v125
    %138 = vmatprep.subr.mxu0 0.0
    %139 = vmatpush1.xpose.msra.mxu0 %v128
    %140 = vmatprep.subr.mxu0 0.0
    %141 = vmatpush1.xpose.msra.mxu0 %v131
    %142 = vmatprep.subr.mxu0 0.0
    %143 = vmatpush1.xpose.msra.mxu0 %v134
    %144 = vmatprep.subr.mxu0 0.0
    %145 = vmatpush1.xpose.msra.mxu0 0.0
    %146 = vmatprep.subr.mxu0 0.0
    %147 = vmatpush1.xpose.msra.mxu0 0.0
    %148 = vmatprep.subr.mxu0 0.0
    %149 = vmatpush1.xpose.msra.mxu0 0.0
    %150 = vmatprep.subr.mxu0 0.0
    %151 = vmatpush1.xpose.msra.mxu0 0.0
    %152 = vmatprep.subr.mxu0 0.0
    %153 = vmatpush1.xpose.msra.mxu0 0.0
    %154 = vmatprep.subr.mxu0 0.0
    %155 = vmatpush1.xpose.msra.mxu0 0.0
    %156 = vmatprep.subr.mxu0 0.0
    %157 = vmatpush1.xpose.msra.mxu0 0.0
    %158 = vmatprep.subr.mxu0 0.0
    %159 = vmatpush1.xpose.msra.mxu0 0.0
    %160 = vmatprep.subr.mxu0 0.0
    %161 = vmatpush1.xpose.msra.mxu0 0.0
    %162 = vmatprep.subr.mxu0 0.0
    %163 = vmatpush1.xpose.msra.mxu0 0.0
    %164 = vmatprep.subr.mxu0 0.0
    %165 = vmatpush1.xpose.msra.mxu0 0.0
    %166 = vmatprep.subr.mxu0 0.0
    %167 = vmatpush1.xpose.msra.mxu0 0.0
    %168 = vmatprep.subr.mxu0 0.0
    %169 = vmatpush1.xpose.msra.mxu0 0.0
    %170 = vmatprep.subr.mxu0 0.0
    %171 = vmatpush1.xpose.msra.mxu0 0.0
    %172 = vmatprep.subr.mxu0 0.0
    %173 = vmatpush1.xpose.msra.mxu0 0.0
    %174 = vmatprep.subr.mxu0 0.0
    %175 = vmatpush1.xpose.msra.mxu0 0.0
    %176 = vmatprep.subr.mxu0 0.0
    %177 = vmatpush1.xpose.msra.mxu0 0.0
    %178 = vmatprep.subr.mxu0 0.0
    %179 = vmatpush1.xpose.msra.mxu0 0.0
    %180 = vmatprep.subr.mxu0 0.0
    %181 = vmatpush1.xpose.msra.mxu0 0.0
    %182 = vmatprep.subr.mxu0 0.0
    %183 = vmatpush1.xpose.msra.mxu0 0.0
    %184 = vmatprep.subr.mxu0 0.0
    %185 = vmatpush1.xpose.msra.mxu0 0.0
    %186 = vmatprep.subr.mxu0 0.0
    %187 = vmatpush1.xpose.msra.mxu0 0.0
    %188 = vmatprep.subr.mxu0 0.0
    %189 = vmatpush1.xpose.msra.mxu0 0.0
    %190 = vmatprep.subr.mxu0 0.0
    %191 = vmatpush1.xpose.msra.mxu0 0.0
    %192 = vmatprep.subr.mxu0 0.0
    %193 = vmatpush1.xpose.msra.mxu0 0.0
    %194 = vmatprep.subr.mxu0 0.0
    %195 = vmatpush1.xpose.msra.mxu0 0.0
    %196 = vmatprep.subr.mxu0 0.0
    %197 = vmatpush1.xpose.msra.mxu0 0.0
    %198 = vmatprep.subr.mxu0 0.0
    %199 = vmatpush1.xpose.msra.mxu0 0.0
    %200 = vmatprep.mubr.f32.mxu0 0.0
    %201 = vmatmul.mubr.f32.gmra.mrb[0].mxu0 %v119
    %v202 = vpop.f32.mrb[0].mxu0
    %v203 = vadd.f32 0.0, %v202
    %v204 = vpop.f32.mrb[0].mxu0
    %205 = vmatprep.mubr.f32.mxu0 0.0
    %206 = vmatmul.mubr.f32.gmra.mrb[0].mxu0 %v122
    %v207 = vpop.f32.mrb[0].mxu0
    %v208 = vadd.f32 0.0, %v207
    %v209 = vpop.f32.mrb[0].mxu0
    %210 = vdwg.mxu0
    %v211 = vadd.f32 %v111, %v203
    %v212 = vadd.f32 %v112, %v208
    %213 = vst.msk [vmem:[#allocation2] sm:$0xff] %vm117, %v211
    %214 = vst.msk [vmem:[#allocation2 + $0x8] sm:$0xff] %vm117, %v212
    // Predicated region
    $region50: #{tpu_custom_call.1} parent=1 // pred_check
      %p215 = pneg %p103
    $region51: #{tpu_custom_call.1} parent=1 // pred_check_branch
      %217 = sbr.rel (%p215) target = $region53
    $region52: #{tpu_custom_call.1} parent=1 // pred_region
      %v218 = vld [vmem:[#allocation3] sm:$0xff]
      %v219 = vld [vmem:[#allocation3 + $0x8] sm:$0xff]
      %v220 = vld [vmem:[#allocation9] sm:$0xff]
      %v221 = vld [vmem:[#allocation9 + $0x8] sm:$0xff]
      %v223 = vsel %vm117, %v220, 0
      %v226 = vsel %vm117, %v221, 0
      %228 = vmatprep.subr.mxu0 0.0
      %229 = vmatpush1.xpose.msra.mxu0 %v223
      %230 = vmatprep.subr.mxu0 0.0
      %231 = vmatpush1.xpose.msra.mxu0 %v226
      %232 = vmatprep.subr.mxu0 0.0
      %233 = vmatpush1.xpose.msra.mxu0 0.0
      %234 = vmatprep.subr.mxu0 0.0
      %235 = vmatpush1.xpose.msra.mxu0 0.0
      %236 = vmatprep.subr.mxu0 0.0
      %237 = vmatpush1.xpose.msra.mxu0 0.0
      %238 = vmatprep.subr.mxu0 0.0
      %239 = vmatpush1.xpose.msra.mxu0 0.0
      %240 = vmatprep.subr.mxu0 0.0
      %241 = vmatpush1.xpose.msra.mxu0 0.0
      %242 = vmatprep.subr.mxu0 0.0
      %243 = vmatpush1.xpose.msra.mxu0 0.0
      %244 = vmatprep.subr.mxu0 0.0
      %245 = vmatpush1.xpose.msra.mxu0 0.0
      %246 = vmatprep.subr.mxu0 0.0
      %247 = vmatpush1.xpose.msra.mxu0 0.0
      %248 = vmatprep.subr.mxu0 0.0
      %249 = vmatpush1.xpose.msra.mxu0 0.0
      %250 = vmatprep.subr.mxu0 0.0
      %251 = vmatpush1.xpose.msra.mxu0 0.0
      %252 = vmatprep.subr.mxu0 0.0
      %253 = vmatpush1.xpose.msra.mxu0 0.0
      %254 = vmatprep.subr.mxu0 0.0
      %255 = vmatpush1.xpose.msra.mxu0 0.0
      %256 = vmatprep.subr.mxu0 0.0
      %257 = vmatpush1.xpose.msra.mxu0 0.0
      %258 = vmatprep.subr.mxu0 0.0
      %259 = vmatpush1.xpose.msra.mxu0 0.0
      %260 = vmatprep.subr.mxu0 0.0
      %261 = vmatpush1.xpose.msra.mxu0 0.0
      %262 = vmatprep.subr.mxu0 0.0
      %263 = vmatpush1.xpose.msra.mxu0 0.0
      %264 = vmatprep.subr.mxu0 0.0
      %265 = vmatpush1.xpose.msra.mxu0 0.0
      %266 = vmatprep.subr.mxu0 0.0
      %267 = vmatpush1.xpose.msra.mxu0 0.0
      %268 = vmatprep.subr.mxu0 0.0
      %269 = vmatpush1.xpose.msra.mxu0 0.0
      %270 = vmatprep.subr.mxu0 0.0
      %271 = vmatpush1.xpose.msra.mxu0 0.0
      %272 = vmatprep.subr.mxu0 0.0
      %273 = vmatpush1.xpose.msra.mxu0 0.0
      %274 = vmatprep.subr.mxu0 0.0
      %275 = vmatpush1.xpose.msra.mxu0 0.0
      %276 = vmatprep.subr.mxu0 0.0
      %277 = vmatpush1.xpose.msra.mxu0 0.0
      %278 = vmatprep.subr.mxu0 0.0
      %279 = vmatpush1.xpose.msra.mxu0 0.0
      %280 = vmatprep.subr.mxu0 0.0
      %281 = vmatpush1.xpose.msra.mxu0 0.0
      %282 = vmatprep.subr.mxu0 0.0
      %283 = vmatpush1.xpose.msra.mxu0 0.0
      %284 = vmatprep.subr.mxu0 0.0
      %285 = vmatpush1.xpose.msra.mxu0 0.0
      %286 = vmatprep.subr.mxu0 0.0
      %287 = vmatpush1.xpose.msra.mxu0 0.0
      %288 = vmatprep.subr.mxu0 0.0
      %289 = vmatpush1.xpose.msra.mxu0 0.0
      %290 = vmatprep.subr.mxu0 0.0
      %291 = vmatpush1.xpose.msra.mxu0 0.0
      %292 = vmatprep.mubr.f32.mxu0 0.0
      %293 = vmatmul.mubr.f32.gmra.mrb[0].mxu0 %v119
      %v294 = vpop.f32.mrb[0].mxu0
      %v295 = vadd.f32 0.0, %v294
      %v296 = vpop.f32.mrb[0].mxu0
      %297 = vmatprep.mubr.f32.mxu0 0.0
      %298 = vmatmul.mubr.f32.gmra.mrb[0].mxu0 %v122
      %v299 = vpop.f32.mrb[0].mxu0
      %v300 = vadd.f32 0.0, %v299
      %v301 = vpop.f32.mrb[0].mxu0
      %302 = vdwg.mxu0
      %v303 = vadd.f32 %v218, %v295
      %v304 = vadd.f32 %v219, %v300
      %vm305 = vcmask 130048
      %306 = vst.msk [vmem:[#allocation3] sm:$0xff] %vm305, %v303
      %307 = vst.msk [vmem:[#allocation3 + $0x8] sm:$0xff] %vm305, %v304
    $region53: #{tpu_custom_call.1} parent=1 // pred_fallthru
      _
    // Predicated region
    $region54: #{tpu_custom_call.1} parent=1 // pred_check
      %p308 = pneg %p89
    $region55: #{tpu_custom_call.1} parent=1 // pred_check_branch
      %310 = sbr.rel (%p308) target = $region57
    $region56: #{tpu_custom_call.1} parent=1 // pred_region
      %v311 = vld [vmem:[#allocation3] sm:$0xff]
      %v312 = vld [vmem:[#allocation3 + $0x8] sm:$0xff]
      %v313 = vmul.f32 %v311, 2.0
      %v314 = vmul.f32 %v312, 2.0
      %v315 = vld [vmem:[#allocation10] sm:$0xff]
      %v316 = vld [vmem:[#allocation10 + $0x8] sm:$0xff]
      %v317 = vld [vmem:[#allocation10 + $0x10] sm:$0xff]
      %v318 = vld [vmem:[#allocation10 + $0x18] sm:$0xff]
      %vm319 = vcmask 130048
      %v321 = vsel %vm319, %v313, 0
      %v324 = vsel %vm319, %v314, 0
      %v327 = vsel %vm319, %v315, 0
      %v330 = vsel %vm319, %v316, 0
      %v333 = vsel %vm319, %v317, 0
      %v336 = vsel %vm319, %v318, 0
      %338 = vmatprep.subr.mxu0 0.0
      %339 = vmatpush1.xpose.msra.mxu0 %v327
      %340 = vmatprep.subr.mxu0 0.0
      %341 = vmatpush1.xpose.msra.mxu0 %v330
      %342 = vmatprep.subr.mxu0 0.0
      %343 = vmatpush1.xpose.msra.mxu0 %v333
      %344 = vmatprep.subr.mxu0 0.0
      %345 = vmatpush1.xpose.msra.mxu0 %v336
      %346 = vmatprep.subr.mxu0 0.0
      %347 = vmatpush1.xpose.msra.mxu0 0.0
      %348 = vmatprep.subr.mxu0 0.0
      %349 = vmatpush1.xpose.msra.mxu0 0.0
      %350 = vmatprep.subr.mxu0 0.0
      %351 = vmatpush1.xpose.msra.mxu0 0.0
      %352 = vmatprep.subr.mxu0 0.0
      %353 = vmatpush1.xpose.msra.mxu0 0.0
      %354 = vmatprep.subr.mxu0 0.0
      %355 = vmatpush1.xpose.msra.mxu0 0.0
      %356 = vmatprep.subr.mxu0 0.0
      %357 = vmatpush1.xpose.msra.mxu0 0.0
      %358 = vmatprep.subr.mxu0 0.0
      %359 = vmatpush1.xpose.msra.mxu0 0.0
      %360 = vmatprep.subr.mxu0 0.0
      %361 = vmatpush1.xpose.msra.mxu0 0.0
      %362 = vmatprep.subr.mxu0 0.0
      %363 = vmatpush1.xpose.msra.mxu0 0.0
      %364 = vmatprep.subr.mxu0 0.0
      %365 = vmatpush1.xpose.msra.mxu0 0.0
      %366 = vmatprep.subr.mxu0 0.0
      %367 = vmatpush1.xpose.msra.mxu0 0.0
      %368 = vmatprep.subr.mxu0 0.0
      %369 = vmatpush1.xpose.msra.mxu0 0.0
      %370 = vmatprep.subr.mxu0 0.0
      %371 = vmatpush1.xpose.msra.mxu0 0.0
      %372 = vmatprep.subr.mxu0 0.0
      %373 = vmatpush1.xpose.msra.mxu0 0.0
      %374 = vmatprep.subr.mxu0 0.0
      %375 = vmatpush1.xpose.msra.mxu0 0.0
      %376 = vmatprep.subr.mxu0 0.0
      %377 = vmatpush1.xpose.msra.mxu0 0.0
      %378 = vmatprep.subr.mxu0 0.0
      %379 = vmatpush1.xpose.msra.mxu0 0.0
      %380 = vmatprep.subr.mxu0 0.0
      %381 = vmatpush1.xpose.msra.mxu0 0.0
      %382 = vmatprep.subr.mxu0 0.0
      %383 = vmatpush1.xpose.msra.mxu0 0.0
      %384 = vmatprep.subr.mxu0 0.0
      %385 = vmatpush1.xpose.msra.mxu0 0.0
      %386 = vmatprep.subr.mxu0 0.0
      %387 = vmatpush1.xpose.msra.mxu0 0.0
      %388 = vmatprep.subr.mxu0 0.0
      %389 = vmatpush1.xpose.msra.mxu0 0.0
      %390 = vmatprep.subr.mxu0 0.0
      %391 = vmatpush1.xpose.msra.mxu0 0.0
      %392 = vmatprep.subr.mxu0 0.0
      %393 = vmatpush1.xpose.msra.mxu0 0.0
      %394 = vmatprep.subr.mxu0 0.0
      %395 = vmatpush1.xpose.msra.mxu0 0.0
      %396 = vmatprep.subr.mxu0 0.0
      %397 = vmatpush1.xpose.msra.mxu0 0.0
      %398 = vmatprep.subr.mxu0 0.0
      %399 = vmatpush1.xpose.msra.mxu0 0.0
      %400 = vmatprep.subr.mxu0 0.0
      %401 = vmatpush1.xpose.msra.mxu0 0.0
      %402 = vmatprep.mubr.f32.mxu0 0.0
      %403 = vmatmul.mubr.f32.gmra.mrb[0].mxu0 %v321
      %v404 = vpop.f32.mrb[0].mxu0
      %v405 = vadd.f32 0.0, %v404
      %v406 = vpop.f32.mrb[0].mxu0
      %407 = vmatprep.mubr.f32.mxu0 0.0
      %408 = vmatmul.mubr.f32.gmra.mrb[0].mxu0 %v324
      %v409 = vpop.f32.mrb[0].mxu0
      %v410 = vadd.f32 0.0, %v409
      %v411 = vpop.f32.mrb[0].mxu0
      %412 = vdwg.mxu0
      %v413 = vld [vmem:[#allocation2] sm:$0xff]
      %v414 = vld [vmem:[#allocation2 + $0x8] sm:$0xff]
      %v415 = vadd.f32 %v413, %v405
      %v416 = vadd.f32 %v414, %v410
      %417 = vst.msk [vmem:[#allocation13] sm:$0xff] %vm117, %v415
      %418 = vst.msk [vmem:[#allocation13 + $0x8] sm:$0xff] %vm117, %v416
    $region57: #{tpu_custom_call.1} parent=1 // pred_fallthru
      _
    // Predicated region
    $region58: #{tpu_custom_call.1} parent=1 // pred_check
      _
    $region59: #{tpu_custom_call.1} parent=1 // pred_check_branch
      %420 = sbr.rel (0) target = $region61
    $region60: #{tpu_custom_call.1} parent=1 // pred_region
      %s422 = ssub.s32 256, 256
      %423 = vsyncadd [#allocation6], %s422
      %s424 = sshll.u32 [#allocation13], 4
      %s425 = int_to_ptr.vmem [resolvable:$true] %s424
      %430 = dma.vmem_to_hbm [thread:$0]  %s425, 256, %s5, [#allocation6], 128, 128, 8
    $region61: #{tpu_custom_call.1} parent=1 // pred_fallthru
      _
    // Predicated region
    $region62: #{tpu_custom_call.1} parent=1 // pred_check
      _
    $region63: #{tpu_custom_call.1} parent=1 // pred_check_branch
      %432 = sbr.rel (0) target = $region65
    $region64: #{tpu_custom_call.1} parent=1 // pred_region
      %433 = dma.done [#allocation6], 256
    $region65: #{tpu_custom_call.1} parent=1 // pred_fallthru
      _
    %434 = vsyncpa [#allocation5], 1
    %435 = vsyncpa [#allocation8], 1
    %436 = vsyncpa [#allocation11], 1
    %437 = vsyncpa [#allocation6], 1

</llo_original>
